<compile_context>
chip_gen: v7x
topology: tpu7x:2x2x1
jax: 0.10.0
libtpu: 0.0.40
codegen_flags: <defaults>
</compile_context>

<pallas_src>
import functools
import math

import jax
import jax.numpy as jnp
import numpy as np
from jax.experimental import pallas as pl
from jax.experimental.pallas import tpu as pltpu


def _round_up(x, m):
    return ((x + m - 1) // m) * m


def _pick_pack_factor(d_out, ndim):
    """Smallest k such that k*d_out is a multiple of 128 (full unmasked
    128-lane rows), bounded so the unrolled in-kernel MAC (k*ndim terms)
    stays small."""
    best = 1
    for cand in range(1, 33):
        if cand * ndim > 64 or cand * d_out > 2048:
            break
        best = cand
        if (cand * d_out) % 128 == 0:
            return cand
    # No exact multiple within bounds: densest bounded k (>= ~128 lanes).
    return max(1, min(best, -(-128 // d_out)))


def _rope_freq_kernel(coords_ref, w_ref, cos_ref, sin_ref, *, kk):
    """phase = coords_r @ W2 (block-diagonal), via an exact-f32 VPU MAC.

    coords_ref: (TM, kk)        f32, kk = k*ndim (k tokens packed per row)
    w_ref:      (kk, k*d_out)   f32, block-diag omega matrix (pad cols = 0)
    cos_ref/sin_ref: (TM, k*d_out) f32

    Padding columns have phase exactly 0 -> cos=1, sin=0, i.e. the (1+0j)
    padding of torch.polar is produced in-kernel for free.
    """
    coords = coords_ref[...]
    w = w_ref[...]
    phase = coords[:, 0:1] * w[0:1, :]
    for d in range(1, kk):
        phase = phase + coords[:, d:d + 1] * w[d:d + 1, :]
    cos_ref[...] = jnp.cos(phase)
    sin_ref[...] = jnp.sin(phase)


def rope_frequency(coords, dim, max_wavelength=10000.0, assert_positive=False,
                   block_m=None, return_cos_sin=False):
    """JAX/Pallas equivalent of RopeFrequency.forward.

    coords: (..., ndim) array of (non-negative) positions.
    Returns complex64 of shape (..., dim // 2), or (cos, sin) f32 planes if
    return_cos_sin=True (lets a fused rotary-apply consumer skip the complex
    assembly pass entirely).
    """
    ndim = coords.shape[-1]

    # --- parameter setup (mirrors nn.Module.__init__) -----------------------
    ndim_padding = dim % ndim
    dim_per_ndim = (dim - ndim_padding) // ndim
    sincos_padding = dim_per_ndim % 2
    padding = ndim_padding + sincos_padding * ndim
    edpw = (dim - padding) // ndim
    assert edpw > 0
    assert padding % 2 == 0
    arange = np.arange(0, edpw, 2, dtype=np.float32)
    omega = (1.0 / (max_wavelength ** (arange / edpw))).astype(np.float32)
    F = int(omega.shape[0])
    live = ndim * F
    pad_half = padding // 2
    d_out = live + pad_half                     # == dim // 2

    # --- lane densification: pack k tokens per kernel row -------------------
    # Output planes are (M, d_out) row-major, so (M//k, k*d_out) is a free
    # view; likewise coords (M, ndim) -> (M//k, k*ndim).
    k = _pick_pack_factor(d_out, ndim)
    kk = k * ndim
    n_lanes = k * d_out

    # Block-diagonal omega matrix: W2[t*ndim + d, t*d_out + d*F + f] = omega[f]
    # (pad columns are all-zero -> phase 0 -> 1 + 0j).
    W = np.zeros((ndim, d_out), np.float32)
    for d in range(ndim):
        W[d, d * F:(d + 1) * F] = omega
    W2 = jnp.asarray(np.kron(np.eye(k, dtype=np.float32), W))   # (kk, n_lanes)

    # --- flatten / pad the token axis ----------------------------------------
    leading = coords.shape[:-1]
    M = int(math.prod(leading)) if leading else 1
    coords2 = coords.astype(jnp.float32).reshape(M, ndim)

    if assert_positive:
        # Debug-only: forces a device->host sync and is NOT jit/trace safe.
        assert bool(jax.device_get(jnp.all(coords2 >= 0))), "coords must be >= 0"

    M_pad = _round_up(M, k)
    if M_pad != M:
        coords2 = jnp.concatenate(
            [coords2, jnp.zeros((M_pad - M, ndim), jnp.float32)], axis=0)
    M_r = M_pad // k
    coords_r = coords2.reshape(M_r, kk)                          # free view

    # --- tile size: VMEM-budgeted, lane-padding aware ------------------------
    if block_m is None:
        budget = 12 << 20                        # ~12 MiB of double-buffered tiles
        in_lanes = _round_up(kk, 128)            # coords tile pads to 128 lanes
        out_lanes = _round_up(n_lanes, 128)
        bytes_per_row = 2 * 4 * (in_lanes + 2 * out_lanes)
        block_m = max(8, min(4096, budget // bytes_per_row))
    tm = max(8, (block_m // 8) * 8)
    # v7x megacore: keep >= 2 grid steps whenever there is enough work.
    tm = min(tm, max(8, _round_up(pl.cdiv(M_r, 2), 8)))
    tm = min(tm, _round_up(M_r, 8))
    grid = (pl.cdiv(M_r, tm),)

    kernel = functools.partial(_rope_freq_kernel, kk=kk)

    cost = pl.CostEstimate(
        flops=2 * M_r * n_lanes * kk,
        transcendentals=2 * M_r * n_lanes,
        bytes_accessed=4 * (M_r * kk + grid[0] * kk * n_lanes + 2 * M_r * n_lanes),
    )

    cos_r, sin_r = pl.pallas_call(
        kernel,
        out_shape=(jax.ShapeDtypeStruct((M_r, n_lanes), jnp.float32),
                   jax.ShapeDtypeStruct((M_r, n_lanes), jnp.float32)),
        grid_spec=pltpu.PrefetchScalarGridSpec(
            num_scalar_prefetch=0,
            grid=grid,
            in_specs=[pl.BlockSpec((tm, kk), lambda i: (i, 0)),
                      pl.BlockSpec((kk, n_lanes), lambda i: (0, 0))],
            out_specs=(pl.BlockSpec((tm, n_lanes), lambda i: (i, 0)),
                       pl.BlockSpec((tm, n_lanes), lambda i: (i, 0)))),
        compiler_params=pltpu.CompilerParams(
            dimension_semantics=("parallel",),
            vmem_limit_bytes=32 * 1024 * 1024),
        cost_estimate=cost,
    )(coords_r, W2)

    cos = cos_r.reshape(M_pad, d_out)            # free view (contiguous)
    sin = sin_r.reshape(M_pad, d_out)
    if M_pad != M:
        cos = cos[:M]
        sin = sin[:M]
    if return_cos_sin:
        return cos.reshape(*leading, d_out), sin.reshape(*leading, d_out)
    # Single fused assembly pass; pad columns already carry (1, 0).
    out = jax.lax.complex(cos, sin)
    return out.reshape(*leading, d_out)


def _rope_frequency_ref(coords, dim, max_wavelength=10000.0):
    """Pure-JAX reference mirroring the PyTorch forward exactly."""
    ndim = coords.shape[-1]
    ndim_padding = dim % ndim
    dim_per_ndim = (dim - ndim_padding) // ndim
    sincos_padding = dim_per_ndim % 2
    padding = ndim_padding + sincos_padding * ndim
    edpw = (dim - padding) // ndim
    arange = np.arange(0, edpw, 2, dtype=np.float32)
    omega = jnp.asarray((1.0 / (max_wavelength ** (arange / edpw))).astype(np.float32))
    out = coords.astype(jnp.float32)[..., None] * omega[None, :]   # (..., ndim, F)
    out = out.reshape(*coords.shape[:-1], -1)                      # (..., ndim*F)
    pad = jnp.zeros((*out.shape[:-1], padding // 2), jnp.float32)
    out = jnp.concatenate([out, pad], axis=-1)
    return jax.lax.complex(jnp.cos(out), jnp.sin(out))


def _check(out, ref, shape):
    assert out.shape == ref.shape == shape, (out.shape, ref.shape, shape)
    assert out.dtype == jnp.complex64, out.dtype
    assert jnp.allclose(out.real, ref.real, atol=2e-5, rtol=2e-5)
    assert jnp.allclose(out.imag, ref.imag, atol=2e-5, rtol=2e-5)


if __name__ == "__main__":
    key = jax.random.PRNGKey(0)
    k1, k2, k3, k4 = jax.random.split(key, 4)

    # Case 1: 2-D coords, no padding (dim=32, ndim=2 -> 16 complex freqs).
    coords2d = jax.random.uniform(k1, (2, 8, 2), dtype=jnp.float32) * 16.0
    out2d = jax.block_until_ready(rope_frequency(coords2d, dim=32))
    _check(out2d, _rope_frequency_ref(coords2d, dim=32), (2, 8, 16))

    # Case 2: 3-D coords with padding columns (dim=32, ndim=3 -> 15 live + 1 pad).
    coords3d = jax.random.uniform(k2, (2, 8, 3), dtype=jnp.float32) * 16.0
    out3d = jax.block_until_ready(rope_frequency(coords3d, dim=32))
    _check(out3d, _rope_frequency_ref(coords3d, dim=32), (2, 8, 16))

    # Case 3: token count not a multiple of the packing factor (ragged M).
    coords_sm = jax.random.uniform(k3, (3, 2), dtype=jnp.float32) * 16.0
    out_sm = jax.block_until_ready(rope_frequency(coords_sm, dim=32))
    _check(out_sm, _rope_frequency_ref(coords_sm, dim=32), (3, 16))

    # Case 4: larger M -> multi-step "parallel" grid with a ragged last block.
    coords_lg = jax.random.uniform(k4, (2, 96, 2), dtype=jnp.float32) * 16.0
    out_lg = jax.block_until_ready(rope_frequency(coords_lg, dim=32))
    _check(out_lg, _rope_frequency_ref(coords_lg, dim=32), (2, 96, 16))

    # Case 5: cos/sin plane mode (skips the complex assembly pass).
    cos_p, sin_p = rope_frequency(coords2d, dim=32, return_cos_sin=True)
    ref = _rope_frequency_ref(coords2d, dim=32)
    assert jnp.allclose(jax.block_until_ready(cos_p), ref.real, atol=2e-5, rtol=2e-5)
    assert jnp.allclose(jax.block_until_ready(sin_p), ref.imag, atol=2e-5, rtol=2e-5)

    print("KERNEL_OK")
</pallas_src>

<mosaic_0001>
module attributes {stable_mosaic.version = 11 : i64} {
  func.func @_rope_freq_kernel(%arg0: i32, %arg1: memref<8x16xf32, #tpu.memory_space<vmem>>, %arg2: memref<16x128xf32, #tpu.memory_space<vmem>>, %arg3: memref<8x128xf32, #tpu.memory_space<vmem>>, %arg4: memref<8x128xf32, #tpu.memory_space<vmem>>) attributes {dimension_semantics = [#tpu.dimension_semantics<parallel>], iteration_bounds = array<i64: 1>, scalar_prefetch = 0 : i64, scratch_operands = 0 : i64, tpu.core_type = #tpu.core_type<tc>, window_params = [{transform_indices = @transform_0, window_bounds = array<i64: 8, 16>}, {pipeline_mode = #tpu.pipeline_mode<synchronous>, transform_indices = @transform_1, window_bounds = array<i64: 16, 128>}, {transform_indices = @transform_2, window_bounds = array<i64: 8, 128>}, {transform_indices = @transform_3, window_bounds = array<i64: 8, 128>}]} {
    %c0 = arith.constant 0 : index
    %c0_0 = arith.constant 0 : index
    %0 = vector.load %arg1[%c0, %c0_0] : memref<8x16xf32, #tpu.memory_space<vmem>>, vector<8x16xf32>
    %c0_1 = arith.constant 0 : index
    %c0_2 = arith.constant 0 : index
    %1 = vector.load %arg2[%c0_1, %c0_2] : memref<16x128xf32, #tpu.memory_space<vmem>>, vector<16x128xf32>
    %2 = vector.extract_strided_slice %0 {offsets = [0, 0], sizes = [8, 1], strides = [1, 1]} : vector<8x16xf32> to vector<8x1xf32>
    %3 = vector.extract_strided_slice %1 {offsets = [0, 0], sizes = [1, 128], strides = [1, 1]} : vector<16x128xf32> to vector<1x128xf32>
    %4 = vector.broadcast %2 : vector<8x1xf32> to vector<8x128xf32>
    %5 = vector.broadcast %3 : vector<1x128xf32> to vector<8x128xf32>
    %6 = arith.mulf %4, %5 : vector<8x128xf32>
    %7 = vector.extract_strided_slice %0 {offsets = [0, 1], sizes = [8, 1], strides = [1, 1]} : vector<8x16xf32> to vector<8x1xf32>
    %8 = vector.extract_strided_slice %1 {offsets = [1, 0], sizes = [1, 128], strides = [1, 1]} : vector<16x128xf32> to vector<1x128xf32>
    %9 = vector.broadcast %7 : vector<8x1xf32> to vector<8x128xf32>
    %10 = vector.broadcast %8 : vector<1x128xf32> to vector<8x128xf32>
    %11 = arith.mulf %9, %10 : vector<8x128xf32>
    %12 = arith.addf %6, %11 : vector<8x128xf32>
    %13 = vector.extract_strided_slice %0 {offsets = [0, 2], sizes = [8, 1], strides = [1, 1]} : vector<8x16xf32> to vector<8x1xf32>
    %14 = vector.extract_strided_slice %1 {offsets = [2, 0], sizes = [1, 128], strides = [1, 1]} : vector<16x128xf32> to vector<1x128xf32>
    %15 = vector.broadcast %13 : vector<8x1xf32> to vector<8x128xf32>
    %16 = vector.broadcast %14 : vector<1x128xf32> to vector<8x128xf32>
    %17 = arith.mulf %15, %16 : vector<8x128xf32>
    %18 = arith.addf %12, %17 : vector<8x128xf32>
    %19 = vector.extract_strided_slice %0 {offsets = [0, 3], sizes = [8, 1], strides = [1, 1]} : vector<8x16xf32> to vector<8x1xf32>
    %20 = vector.extract_strided_slice %1 {offsets = [3, 0], sizes = [1, 128], strides = [1, 1]} : vector<16x128xf32> to vector<1x128xf32>
    %21 = vector.broadcast %19 : vector<8x1xf32> to vector<8x128xf32>
    %22 = vector.broadcast %20 : vector<1x128xf32> to vector<8x128xf32>
    %23 = arith.mulf %21, %22 : vector<8x128xf32>
    %24 = arith.addf %18, %23 : vector<8x128xf32>
    %25 = vector.extract_strided_slice %0 {offsets = [0, 4], sizes = [8, 1], strides = [1, 1]} : vector<8x16xf32> to vector<8x1xf32>
    %26 = vector.extract_strided_slice %1 {offsets = [4, 0], sizes = [1, 128], strides = [1, 1]} : vector<16x128xf32> to vector<1x128xf32>
    %27 = vector.broadcast %25 : vector<8x1xf32> to vector<8x128xf32>
    %28 = vector.broadcast %26 : vector<1x128xf32> to vector<8x128xf32>
    %29 = arith.mulf %27, %28 : vector<8x128xf32>
    %30 = arith.addf %24, %29 : vector<8x128xf32>
    %31 = vector.extract_strided_slice %0 {offsets = [0, 5], sizes = [8, 1], strides = [1, 1]} : vector<8x16xf32> to vector<8x1xf32>
    %32 = vector.extract_strided_slice %1 {offsets = [5, 0], sizes = [1, 128], strides = [1, 1]} : vector<16x128xf32> to vector<1x128xf32>
    %33 = vector.broadcast %31 : vector<8x1xf32> to vector<8x128xf32>
    %34 = vector.broadcast %32 : vector<1x128xf32> to vector<8x128xf32>
    %35 = arith.mulf %33, %34 : vector<8x128xf32>
    %36 = arith.addf %30, %35 : vector<8x128xf32>
    %37 = vector.extract_strided_slice %0 {offsets = [0, 6], sizes = [8, 1], strides = [1, 1]} : vector<8x16xf32> to vector<8x1xf32>
    %38 = vector.extract_strided_slice %1 {offsets = [6, 0], sizes = [1, 128], strides = [1, 1]} : vector<16x128xf32> to vector<1x128xf32>
    %39 = vector.broadcast %37 : vector<8x1xf32> to vector<8x128xf32>
    %40 = vector.broadcast %38 : vector<1x128xf32> to vector<8x128xf32>
    %41 = arith.mulf %39, %40 : vector<8x128xf32>
    %42 = arith.addf %36, %41 : vector<8x128xf32>
    %43 = vector.extract_strided_slice %0 {offsets = [0, 7], sizes = [8, 1], strides = [1, 1]} : vector<8x16xf32> to vector<8x1xf32>
    %44 = vector.extract_strided_slice %1 {offsets = [7, 0], sizes = [1, 128], strides = [1, 1]} : vector<16x128xf32> to vector<1x128xf32>
    %45 = vector.broadcast %43 : vector<8x1xf32> to vector<8x128xf32>
    %46 = vector.broadcast %44 : vector<1x128xf32> to vector<8x128xf32>
    %47 = arith.mulf %45, %46 : vector<8x128xf32>
    %48 = arith.addf %42, %47 : vector<8x128xf32>
    %49 = vector.extract_strided_slice %0 {offsets = [0, 8], sizes = [8, 1], strides = [1, 1]} : vector<8x16xf32> to vector<8x1xf32>
    %50 = vector.extract_strided_slice %1 {offsets = [8, 0], sizes = [1, 128], strides = [1, 1]} : vector<16x128xf32> to vector<1x128xf32>
    %51 = vector.broadcast %49 : vector<8x1xf32> to vector<8x128xf32>
    %52 = vector.broadcast %50 : vector<1x128xf32> to vector<8x128xf32>
    %53 = arith.mulf %51, %52 : vector<8x128xf32>
    %54 = arith.addf %48, %53 : vector<8x128xf32>
    %55 = vector.extract_strided_slice %0 {offsets = [0, 9], sizes = [8, 1], strides = [1, 1]} : vector<8x16xf32> to vector<8x1xf32>
    %56 = vector.extract_strided_slice %1 {offsets = [9, 0], sizes = [1, 128], strides = [1, 1]} : vector<16x128xf32> to vector<1x128xf32>
    %57 = vector.broadcast %55 : vector<8x1xf32> to vector<8x128xf32>
    %58 = vector.broadcast %56 : vector<1x128xf32> to vector<8x128xf32>
    %59 = arith.mulf %57, %58 : vector<8x128xf32>
    %60 = arith.addf %54, %59 : vector<8x128xf32>
    %61 = vector.extract_strided_slice %0 {offsets = [0, 10], sizes = [8, 1], strides = [1, 1]} : vector<8x16xf32> to vector<8x1xf32>
    %62 = vector.extract_strided_slice %1 {offsets = [10, 0], sizes = [1, 128], strides = [1, 1]} : vector<16x128xf32> to vector<1x128xf32>
    %63 = vector.broadcast %61 : vector<8x1xf32> to vector<8x128xf32>
    %64 = vector.broadcast %62 : vector<1x128xf32> to vector<8x128xf32>
    %65 = arith.mulf %63, %64 : vector<8x128xf32>
    %66 = arith.addf %60, %65 : vector<8x128xf32>
    %67 = vector.extract_strided_slice %0 {offsets = [0, 11], sizes = [8, 1], strides = [1, 1]} : vector<8x16xf32> to vector<8x1xf32>
    %68 = vector.extract_strided_slice %1 {offsets = [11, 0], sizes = [1, 128], strides = [1, 1]} : vector<16x128xf32> to vector<1x128xf32>
    %69 = vector.broadcast %67 : vector<8x1xf32> to vector<8x128xf32>
    %70 = vector.broadcast %68 : vector<1x128xf32> to vector<8x128xf32>
    %71 = arith.mulf %69, %70 : vector<8x128xf32>
    %72 = arith.addf %66, %71 : vector<8x128xf32>
    %73 = vector.extract_strided_slice %0 {offsets = [0, 12], sizes = [8, 1], strides = [1, 1]} : vector<8x16xf32> to vector<8x1xf32>
    %74 = vector.extract_strided_slice %1 {offsets = [12, 0], sizes = [1, 128], strides = [1, 1]} : vector<16x128xf32> to vector<1x128xf32>
    %75 = vector.broadcast %73 : vector<8x1xf32> to vector<8x128xf32>
    %76 = vector.broadcast %74 : vector<1x128xf32> to vector<8x128xf32>
    %77 = arith.mulf %75, %76 : vector<8x128xf32>
    %78 = arith.addf %72, %77 : vector<8x128xf32>
    %79 = vector.extract_strided_slice %0 {offsets = [0, 13], sizes = [8, 1], strides = [1, 1]} : vector<8x16xf32> to vector<8x1xf32>
    %80 = vector.extract_strided_slice %1 {offsets = [13, 0], sizes = [1, 128], strides = [1, 1]} : vector<16x128xf32> to vector<1x128xf32>
    %81 = vector.broadcast %79 : vector<8x1xf32> to vector<8x128xf32>
    %82 = vector.broadcast %80 : vector<1x128xf32> to vector<8x128xf32>
    %83 = arith.mulf %81, %82 : vector<8x128xf32>
    %84 = arith.addf %78, %83 : vector<8x128xf32>
    %85 = vector.extract_strided_slice %0 {offsets = [0, 14], sizes = [8, 1], strides = [1, 1]} : vector<8x16xf32> to vector<8x1xf32>
    %86 = vector.extract_strided_slice %1 {offsets = [14, 0], sizes = [1, 128], strides = [1, 1]} : vector<16x128xf32> to vector<1x128xf32>
    %87 = vector.broadcast %85 : vector<8x1xf32> to vector<8x128xf32>
    %88 = vector.broadcast %86 : vector<1x128xf32> to vector<8x128xf32>
    %89 = arith.mulf %87, %88 : vector<8x128xf32>
    %90 = arith.addf %84, %89 : vector<8x128xf32>
    %91 = vector.extract_strided_slice %0 {offsets = [0, 15], sizes = [8, 1], strides = [1, 1]} : vector<8x16xf32> to vector<8x1xf32>
    %92 = vector.extract_strided_slice %1 {offsets = [15, 0], sizes = [1, 128], strides = [1, 1]} : vector<16x128xf32> to vector<1x128xf32>
    %93 = vector.broadcast %91 : vector<8x1xf32> to vector<8x128xf32>
    %94 = vector.broadcast %92 : vector<1x128xf32> to vector<8x128xf32>
    %95 = arith.mulf %93, %94 : vector<8x128xf32>
    %96 = arith.addf %90, %95 : vector<8x128xf32>
    %97 = math.cos %96 : vector<8x128xf32>
    %c0_3 = arith.constant 0 : index
    %c0_4 = arith.constant 0 : index
    %98 = vector.load %arg3[%c0_3, %c0_4] : memref<8x128xf32, #tpu.memory_space<vmem>>, vector<8x128xf32>
    tpu.vector_store %arg3[%c0_3, %c0_4], %97 {strides = array<i32>} : memref<8x128xf32, #tpu.memory_space<vmem>>, vector<8x128xf32>,
    %99 = math.sin %96 : vector<8x128xf32>
    %c0_5 = arith.constant 0 : index
    %c0_6 = arith.constant 0 : index
    %100 = vector.load %arg4[%c0_5, %c0_6] : memref<8x128xf32, #tpu.memory_space<vmem>>, vector<8x128xf32>
    tpu.vector_store %arg4[%c0_5, %c0_6], %99 {strides = array<i32>} : memref<8x128xf32, #tpu.memory_space<vmem>>, vector<8x128xf32>,
    return
  }
  func.func @transform_0(%arg0: i32) -> (i32, i32) {
    %c0_i32 = arith.constant 0 : i32
    %c0_i32_0 = arith.constant 0 : i32
    return %arg0, %c0_i32 : i32, i32
  }
  func.func @transform_1(%arg0: i32) -> (i32, i32) {
    %c0_i32 = arith.constant 0 : i32
    %c0_i32_0 = arith.constant 0 : i32
    %c0_i32_1 = arith.constant 0 : i32
    return %c0_i32, %c0_i32_0 : i32, i32
  }
  func.func @transform_2(%arg0: i32) -> (i32, i32) {
    %c0_i32 = arith.constant 0 : i32
    %c0_i32_0 = arith.constant 0 : i32
    return %arg0, %c0_i32 : i32, i32
  }
  func.func @transform_3(%arg0: i32) -> (i32, i32) {
    %c0_i32 = arith.constant 0 : i32
    %c0_i32_0 = arith.constant 0 : i32
    return %arg0, %c0_i32 : i32, i32
  }
}

</mosaic_0001>

<llo_original>
// kernel: tpu_custom_call.1
$region0: #{tpu_custom_call.1}
  #allocation0 [shape = 'u32[]', space=smem, size = 0x4, offset = 0x4, fixed_abs, tag = 'smem constant byte address 0x4 - core index']
  #allocation1 [shape = 'u32[144,128]{1,0:T(1,128)}', space=vmem, size = 0x12000, scoped, tag = 'internal scratch']
  %s0 = inlined_call_operand.hbm [shape: f32[2,16], index: 0, kind: input, shape index: {}]
  %s1 = inlined_call_operand.hbm [shape: f32[16,128], index: 1, kind: input, shape index: {}]
  %s2 = inlined_call_operand.hbm [shape: f32[2,128], index: 2, kind: output, shape index: {0}]
  %s3 = inlined_call_operand.hbm [shape: f32[2,128], index: 3, kind: output, shape index: {1}]
  %4 = xla_tuple %s2, %s3
  %s5 = sld [smem:[#allocation0]]
  $region34: #{tpu_custom_call.1} parent=0
    _
  %s7 = ssub.s32 1, %s5
  %s8 = scalar_select 0, %s7, %s5
  $region1: #{tpu_custom_call.1} parent=0
    #allocation2 [shape = 'u8[4096]{0}', space=vmem, size = 0x1000, scoped, tag = 'input window, operand 0, single buffered']
    #allocation3 [shape = 's32[1]{0}', space=sflag, size = 0x4, scoped, tag = 'scoped memory for tpu_custom_call.1']
    #allocation4 [shape = 's32[1]{0}', space=sflag, size = 0x4, scoped, tag = 'scoped memory for tpu_custom_call.1']
    #allocation5 [shape = 'u8[8192]{0}', space=vmem, size = 0x2000, scoped, tag = 'input window, operand 1, single buffered']
    #allocation6 [shape = 's32[1]{0}', space=sflag, size = 0x4, scoped, tag = 'scoped memory for tpu_custom_call.1']
    #allocation7 [shape = 'u8[4096]{0}', space=vmem, size = 0x1000, scoped, tag = 'output window, operand 0, single buffered']
    #allocation8 [shape = 'u8[4096]{0}', space=vmem, size = 0x1000, scoped, tag = 'output window, operand 1, single buffered']
    #allocation9 [shape = 's32[1]{0}', space=sflag, size = 0x4, scoped, tag = 'scoped memory for tpu_custom_call.1']
    %9 = vsyncpa [#allocation3], 0
    %10 = vsyncpa [#allocation6], 0
    %11 = vsyncpa [#allocation4], 0
    %12 = vsyncpa [#allocation9], 0
    // Predicated region
    $region2: #{tpu_custom_call.1} parent=1 // pred_check
      _
    $region3: #{tpu_custom_call.1} parent=1 // pred_check_branch
      %14 = sbr.rel (0) target = $region5
    $region4: #{tpu_custom_call.1} parent=1 // pred_region
      %s16 = ssub.s32 128, 32
      %17 = vsyncadd [#allocation3], %s16
      %s18 = sshll.u32 [#allocation2], 4
      %s19 = int_to_ptr.vmem [resolvable:$true] %s18
      %24 = dma.hbm_to_vmem [thread:$0]  %s0, 32, %s19, [#allocation3], 32, 32, 2
    $region5: #{tpu_custom_call.1} parent=1 // pred_fallthru
      _
    // Predicated region
    $region6: #{tpu_custom_call.1} parent=1 // pred_check
      _
    $region7: #{tpu_custom_call.1} parent=1 // pred_check_branch
      %26 = sbr.rel (0) target = $region9
    $region8: #{tpu_custom_call.1} parent=1 // pred_region
      %s28 = ssub.s32 256, 256
      %29 = vsyncadd [#allocation6], %s28
      %s30 = sshll.u32 [#allocation5], 4
      %s31 = int_to_ptr.vmem [resolvable:$true] %s30
      %36 = dma.hbm_to_vmem [thread:$0]  %s1, 256, %s31, [#allocation6], 128, 128, 8
    $region9: #{tpu_custom_call.1} parent=1 // pred_fallthru
      _
    // Predicated region
    $region10: #{tpu_custom_call.1} parent=1 // pred_check
      _
    $region11: #{tpu_custom_call.1} parent=1 // pred_check_branch
      %38 = sbr.rel (0) target = $region13
    $region12: #{tpu_custom_call.1} parent=1 // pred_region
      %39 = dma.done [#allocation3], 128
    $region13: #{tpu_custom_call.1} parent=1 // pred_fallthru
      _
    // Predicated region
    $region14: #{tpu_custom_call.1} parent=1 // pred_check
      _
    $region15: #{tpu_custom_call.1} parent=1 // pred_check_branch
      %41 = sbr.rel (0) target = $region17
    $region16: #{tpu_custom_call.1} parent=1 // pred_region
      %42 = dma.done [#allocation6], 256
    $region17: #{tpu_custom_call.1} parent=1 // pred_fallthru
      _
    %v43 = vld [vmem:[#allocation2] sm:$0xff]
    %v44 = vld [vmem:[#allocation5] sm:$0xff]
    %v45 = vld [vmem:[#allocation5 + $0x8] sm:$0xff]
    %47 = vset.pattern.permute.xlu0 0
    %48 = vperm.xlu0 %47, %v43
    %v49 = vpop.permute.xlu0 %48
    %v51 = vlaneseq
    %v52 = vshrl.u32 %v51, 7
    %v53 = vsub.s32 0, %v52
    %v54 = vrot.slane %v44, %v53
    %v55 = vmul.f32 %v49, %v54
    %56 = vset.pattern.permute.xlu0 1
    %57 = vperm.xlu0 %56, %v43
    %v58 = vpop.permute.xlu0 %57
    %v60 = vlaneseq
    %v61 = vshrl.u32 %v60, 7
    %v62 = vsub.s32 1, %v61
    %v63 = vrot.slane %v44, %v62
    %v64 = vmul.f32 %v58, %v63
    %v65 = vadd.f32 %v55, %v64
    %66 = vset.pattern.permute.xlu0 2
    %67 = vperm.xlu0 %66, %v43
    %v68 = vpop.permute.xlu0 %67
    %v70 = vlaneseq
    %v71 = vshrl.u32 %v70, 7
    %v72 = vsub.s32 2, %v71
    %v73 = vrot.slane %v44, %v72
    %v74 = vmul.f32 %v68, %v73
    %v75 = vadd.f32 %v65, %v74
    %76 = vset.pattern.permute.xlu0 3
    %77 = vperm.xlu0 %76, %v43
    %v78 = vpop.permute.xlu0 %77
    %v80 = vlaneseq
    %v81 = vshrl.u32 %v80, 7
    %v82 = vsub.s32 3, %v81
    %v83 = vrot.slane %v44, %v82
    %v84 = vmul.f32 %v78, %v83
    %v85 = vadd.f32 %v75, %v84
    %86 = vset.pattern.permute.xlu0 4
    %87 = vperm.xlu0 %86, %v43
    %v88 = vpop.permute.xlu0 %87
    %v90 = vlaneseq
    %v91 = vshrl.u32 %v90, 7
    %v92 = vsub.s32 4, %v91
    %v93 = vrot.slane %v44, %v92
    %v94 = vmul.f32 %v88, %v93
    %v95 = vadd.f32 %v85, %v94
    %96 = vset.pattern.permute.xlu0 5
    %97 = vperm.xlu0 %96, %v43
    %v98 = vpop.permute.xlu0 %97
    %v100 = vlaneseq
    %v101 = vshrl.u32 %v100, 7
    %v102 = vsub.s32 5, %v101
    %v103 = vrot.slane %v44, %v102
    %v104 = vmul.f32 %v98, %v103
    %v105 = vadd.f32 %v95, %v104
    %106 = vset.pattern.permute.xlu0 6
    %107 = vperm.xlu0 %106, %v43
    %v108 = vpop.permute.xlu0 %107
    %v110 = vlaneseq
    %v111 = vshrl.u32 %v110, 7
    %v112 = vsub.s32 6, %v111
    %v113 = vrot.slane %v44, %v112
    %v114 = vmul.f32 %v108, %v113
    %v115 = vadd.f32 %v105, %v114
    %116 = vset.pattern.permute.xlu0 7
    %117 = vperm.xlu0 %116, %v43
    %v118 = vpop.permute.xlu0 %117
    %v120 = vlaneseq
    %v121 = vshrl.u32 %v120, 7
    %v122 = vsub.s32 7, %v121
    %v123 = vrot.slane %v44, %v122
    %v124 = vmul.f32 %v118, %v123
    %v125 = vadd.f32 %v115, %v124
    %126 = vset.pattern.permute.xlu0 8
    %127 = vperm.xlu0 %126, %v43
    %v128 = vpop.permute.xlu0 %127
    %v130 = vlaneseq
    %v131 = vshrl.u32 %v130, 7
    %v132 = vsub.s32 0, %v131
    %v133 = vrot.slane %v45, %v132
    %v134 = vmul.f32 %v128, %v133
    %v135 = vadd.f32 %v125, %v134
    %136 = vset.pattern.permute.xlu0 9
    %137 = vperm.xlu0 %136, %v43
    %v138 = vpop.permute.xlu0 %137
    %v140 = vlaneseq
    %v141 = vshrl.u32 %v140, 7
    %v142 = vsub.s32 1, %v141
    %v143 = vrot.slane %v45, %v142
    %v144 = vmul.f32 %v138, %v143
    %v145 = vadd.f32 %v135, %v144
    %146 = vset.pattern.permute.xlu0 10
    %147 = vperm.xlu0 %146, %v43
    %v148 = vpop.permute.xlu0 %147
    %v150 = vlaneseq
    %v151 = vshrl.u32 %v150, 7
    %v152 = vsub.s32 2, %v151
    %v153 = vrot.slane %v45, %v152
    %v154 = vmul.f32 %v148, %v153
    %v155 = vadd.f32 %v145, %v154
    %156 = vset.pattern.permute.xlu0 11
    %157 = vperm.xlu0 %156, %v43
    %v158 = vpop.permute.xlu0 %157
    %v160 = vlaneseq
    %v161 = vshrl.u32 %v160, 7
    %v162 = vsub.s32 3, %v161
    %v163 = vrot.slane %v45, %v162
    %v164 = vmul.f32 %v158, %v163
    %v165 = vadd.f32 %v155, %v164
    %166 = vset.pattern.permute.xlu0 12
    %167 = vperm.xlu0 %166, %v43
    %v168 = vpop.permute.xlu0 %167
    %v170 = vlaneseq
    %v171 = vshrl.u32 %v170, 7
    %v172 = vsub.s32 4, %v171
    %v173 = vrot.slane %v45, %v172
    %v174 = vmul.f32 %v168, %v173
    %v175 = vadd.f32 %v165, %v174
    %176 = vset.pattern.permute.xlu0 13
    %177 = vperm.xlu0 %176, %v43
    %v178 = vpop.permute.xlu0 %177
    %v180 = vlaneseq
    %v181 = vshrl.u32 %v180, 7
    %v182 = vsub.s32 5, %v181
    %v183 = vrot.slane %v45, %v182
    %v184 = vmul.f32 %v178, %v183
    %v185 = vadd.f32 %v175, %v184
    %186 = vset.pattern.permute.xlu0 14
    %187 = vperm.xlu0 %186, %v43
    %v188 = vpop.permute.xlu0 %187
    %v190 = vlaneseq
    %v191 = vshrl.u32 %v190, 7
    %v192 = vsub.s32 6, %v191
    %v193 = vrot.slane %v45, %v192
    %v194 = vmul.f32 %v188, %v193
    %v195 = vadd.f32 %v185, %v194
    %196 = vset.pattern.permute.xlu0 15
    %197 = vperm.xlu0 %196, %v43
    %v198 = vpop.permute.xlu0 %197
    %v200 = vlaneseq
    %v201 = vshrl.u32 %v200, 7
    %v202 = vsub.s32 7, %v201
    %v203 = vrot.slane %v45, %v202
    %v204 = vmul.f32 %v198, %v203
    %v205 = vadd.f32 %v195, %v204
    %v206 = vand.u32 2147483647, %v205
    %vm207 = vcmp.le.f32.partialorder %v206, 0.7853982
    %vm208 = vcmp.lt.s32.totalorder %v205, 0
    %v209 = vand.u32 %v205, 2139095040
    %v210 = vshrl.u32 %v209, 23
    %v211 = vsub.s32 %v210, 127
    %v212 = vand.u32 2147483647, %v205
    %v213 = vand.u32 %v212, 8388607
    %v214 = vor.u32 %v213, 8388608
    %v215 = vsub.s32 0, %v214
    %v216 = vadd.s32 %v211, 1
    %vm217 = vcmp.gt.s32.totalorder %v216, 0
    %v218 = vsel %vm217, %v216, 0
    %v219 = vshrl.u32 %v218, 5
    %v220 = vand.u32 %v218, 31
    %v221 = vsub.s32 32, %v220
    %v222 = vshrl.u32 683565275, %v221
    %v223 = vshll.u32 683565275, %v220
    %v224 = vshrl.u32 2475754826, %v221
    %v225 = vor.u32 %v223, %v224
    %v226 = vshll.u32 2475754826, %v220
    %v227 = vshrl.u32 2131351028, %v221
    %v228 = vor.u32 %v226, %v227
    %v229 = vshll.u32 2131351028, %v220
    %v230 = vshrl.u32 2102212464, %v221
    %v231 = vor.u32 %v229, %v230
    %v232 = vshll.u32 2102212464, %v220
    %v233 = vshrl.u32 920167782, %v221
    %v234 = vor.u32 %v232, %v233
    %v235 = vshll.u32 920167782, %v220
    %v236 = vshrl.u32 1326507024, %v221
    %v237 = vor.u32 %v235, %v236
    %vm238 = vcmp.lt.s32.totalorder %v219, 1
    %vm239 = vcmp.lt.s32.totalorder %v219, 2
    %vm240 = vcmp.lt.s32.totalorder %v219, 3
    %vm241 = vcmp.lt.s32.totalorder %v219, 4
    %v242 = vsel %vm238, %v222, %v225
    %v243 = vsel %vm241, %v231, 2102212464
    %v244 = vsel %vm240, %v228, %v243
    %v245 = vsel %vm239, %v242, %v244
    %v246 = vsel %vm238, %v225, %v228
    %v247 = vsel %vm241, %v234, 920167782
    %v248 = vsel %vm240, %v231, %v247
    %v249 = vsel %vm239, %v246, %v248
    %v250 = vsel %vm238, %v228, %v231
    %v251 = vsel %vm241, %v237, 1326507024
    %v252 = vsel %vm240, %v234, %v251
    %v253 = vsel %vm239, %v250, %v252
    %v254 = vshll.u32 %v214, 8
    %v255 = vmul.u32.u64.compose %v254, %v253
    %v256 = vextract.low.u32 %v255
    %v257 = vextract.high.u32 %v255
    %v258 = vmul.u32.u64.compose %v254, %v249
    %v259 = vextract.low.u32 %v258
    %v260 = vextract.high.u32 %v258
    %v261 = vmul.u32 %v254, %v245
    %v262 = vadd.s32 %v257, %v259
    %vm263 = vc.u32 %v257, %v259
    %v264 = vadd.s32 %v260, 1
    %v265 = vsel %vm263, %v264, %v260
    %v266 = vadd.s32 %v261, %v265
    %v267 = vadd.s32 %v266, 536870912
    %v268 = vshrl.u32 %v267, 30
    %v269 = vshll.u32 %v268, 30
    %v270 = vsub.s32 %v266, %v269
    %vm271 = vcmp.lt.s32.totalorder %v270, 0
    %v272 = vsub.s32 0, %v270
    %v273 = vsel %vm271, %v272, %v270
    %v274 = vclz %v273
    %v275 = vsub.s32 %v274, 2
    %vm276 = vcmp.gt.s32.totalorder 0, %v275
    %v277 = vsel %vm276, 0, %v275
    %v278 = vsub.s32 32, %v277
    %v279 = vshll.u32 %v270, %v277
    %v280 = vshrl.u32 %v262, %v278
    %v281 = vor.u32 %v279, %v280
    %v282 = vsub.s32 4294967266, %v277
    %v283 = vadd.s32 %v282, 127
    %v284 = vshll.u32 %v283, 23
    %v285 = vor.u32 4788187, %v284
    %v286 = vand.u32 2147483647, %v285
    %v288 = vcvt.s32.f32 %v281
    %v289 = vmul.f32 %v288, %v286
    %v290 = vxor.u32 %v289, 2147483648
    %v291 = vsel %vm208, %v290, %v289
    %v292 = vsub.s32 4, %v268
    %v293 = vsel %vm208, %v292, %v268
    %v294 = vsel %vm207, %v205, %v291
    %v295 = vsel %vm207, 0, %v293
    %v296 = vcosq.f32.pop %v294
    %v297 = vsinq.f32.pop %v294
    %vm298 = vweird.f32 %v205
    %v299 = vand.u32 %v295, 3
    %vm300 = vcmp.lt.s32.totalorder %v299, 2
    %vm301 = vcmp.eq.s32.totalorder %v299, 0
    %v302 = vxor.u32 %v297, 2147483648
    %v303 = vsel %vm301, %v296, %v302
    %vm304 = vcmp.eq.s32.totalorder %v299, 2
    %v305 = vxor.u32 %v296, 2147483648
    %v306 = vsel %vm304, %v305, %v297
    %v307 = vsel %vm300, %v303, %v306
    %v308 = vsel %vm298, nan, %v307
    %309 = vst [vmem:[#allocation7] sm:$0xff] %v308
    %v310 = vand.u32 2147483647, %v205
    %vm311 = vcmp.le.f32.partialorder %v310, 0.7853982
    %vm312 = vcmp.lt.s32.totalorder %v205, 0
    %v313 = vand.u32 %v205, 2139095040
    %v314 = vshrl.u32 %v313, 23
    %v315 = vsub.s32 %v314, 127
    %v316 = vand.u32 2147483647, %v205
    %v317 = vand.u32 %v316, 8388607
    %v318 = vor.u32 %v317, 8388608
    %v319 = vsub.s32 0, %v318
    %v320 = vadd.s32 %v315, 1
    %vm321 = vcmp.gt.s32.totalorder %v320, 0
    %v322 = vsel %vm321, %v320, 0
    %v323 = vshrl.u32 %v322, 5
    %v324 = vand.u32 %v322, 31
    %v325 = vsub.s32 32, %v324
    %v326 = vshrl.u32 683565275, %v325
    %v327 = vshll.u32 683565275, %v324
    %v328 = vshrl.u32 2475754826, %v325
    %v329 = vor.u32 %v327, %v328
    %v330 = vshll.u32 2475754826, %v324
    %v331 = vshrl.u32 2131351028, %v325
    %v332 = vor.u32 %v330, %v331
    %v333 = vshll.u32 2131351028, %v324
    %v334 = vshrl.u32 2102212464, %v325
    %v335 = vor.u32 %v333, %v334
    %v336 = vshll.u32 2102212464, %v324
    %v337 = vshrl.u32 920167782, %v325
    %v338 = vor.u32 %v336, %v337
    %v339 = vshll.u32 920167782, %v324
    %v340 = vshrl.u32 1326507024, %v325
    %v341 = vor.u32 %v339, %v340
    %vm342 = vcmp.lt.s32.totalorder %v323, 1
    %vm343 = vcmp.lt.s32.totalorder %v323, 2
    %vm344 = vcmp.lt.s32.totalorder %v323, 3
    %vm345 = vcmp.lt.s32.totalorder %v323, 4
    %v346 = vsel %vm342, %v326, %v329
    %v347 = vsel %vm345, %v335, 2102212464
    %v348 = vsel %vm344, %v332, %v347
    %v349 = vsel %vm343, %v346, %v348
    %v350 = vsel %vm342, %v329, %v332
    %v351 = vsel %vm345, %v338, 920167782
    %v352 = vsel %vm344, %v335, %v351
    %v353 = vsel %vm343, %v350, %v352
    %v354 = vsel %vm342, %v332, %v335
    %v355 = vsel %vm345, %v341, 1326507024
    %v356 = vsel %vm344, %v338, %v355
    %v357 = vsel %vm343, %v354, %v356
    %v358 = vshll.u32 %v318, 8
    %v359 = vmul.u32.u64.compose %v358, %v357
    %v360 = vextract.low.u32 %v359
    %v361 = vextract.high.u32 %v359
    %v362 = vmul.u32.u64.compose %v358, %v353
    %v363 = vextract.low.u32 %v362
    %v364 = vextract.high.u32 %v362
    %v365 = vmul.u32 %v358, %v349
    %v366 = vadd.s32 %v361, %v363
    %vm367 = vc.u32 %v361, %v363
    %v368 = vadd.s32 %v364, 1
    %v369 = vsel %vm367, %v368, %v364
    %v370 = vadd.s32 %v365, %v369
    %v371 = vadd.s32 %v370, 536870912
    %v372 = vshrl.u32 %v371, 30
    %v373 = vshll.u32 %v372, 30
    %v374 = vsub.s32 %v370, %v373
    %vm375 = vcmp.lt.s32.totalorder %v374, 0
    %v376 = vsub.s32 0, %v374
    %v377 = vsel %vm375, %v376, %v374
    %v378 = vclz %v377
    %v379 = vsub.s32 %v378, 2
    %vm380 = vcmp.gt.s32.totalorder 0, %v379
    %v381 = vsel %vm380, 0, %v379
    %v382 = vsub.s32 32, %v381
    %v383 = vshll.u32 %v374, %v381
    %v384 = vshrl.u32 %v366, %v382
    %v385 = vor.u32 %v383, %v384
    %v386 = vsub.s32 4294967266, %v381
    %v387 = vadd.s32 %v386, 127
    %v388 = vshll.u32 %v387, 23
    %v389 = vor.u32 4788187, %v388
    %v390 = vand.u32 2147483647, %v389
    %v392 = vcvt.s32.f32 %v385
    %v393 = vmul.f32 %v392, %v390
    %v394 = vxor.u32 %v393, 2147483648
    %v395 = vsel %vm312, %v394, %v393
    %v396 = vsub.s32 4, %v372
    %v397 = vsel %vm312, %v396, %v372
    %v398 = vsel %vm311, %v205, %v395
    %v399 = vsel %vm311, 0, %v397
    %v400 = vcosq.f32.pop %v398
    %v401 = vsinq.f32.pop %v398
    %vm402 = vweird.f32 %v205
    %v403 = vadd.s32 %v399, 3
    %v404 = vand.u32 %v403, 3
    %vm405 = vcmp.lt.s32.totalorder %v404, 2
    %vm406 = vcmp.eq.s32.totalorder %v404, 0
    %v407 = vxor.u32 %v401, 2147483648
    %v408 = vsel %vm406, %v400, %v407
    %vm409 = vcmp.eq.s32.totalorder %v404, 2
    %v410 = vxor.u32 %v400, 2147483648
    %v411 = vsel %vm409, %v410, %v401
    %v412 = vsel %vm405, %v408, %v411
    %v413 = vsel %vm402, nan, %v412
    %414 = vst [vmem:[#allocation8] sm:$0xff] %v413
    // Predicated region
    $region18: #{tpu_custom_call.1} parent=1 // pred_check
      _
    $region19: #{tpu_custom_call.1} parent=1 // pred_check_branch
      %416 = sbr.rel (0) target = $region21
    $region20: #{tpu_custom_call.1} parent=1 // pred_region
      %s418 = ssub.s32 128, 32
      %419 = vsyncadd [#allocation4], %s418
      %s420 = sshll.u32 [#allocation7], 4
      %s421 = int_to_ptr.vmem [resolvable:$true] %s420
      %426 = dma.vmem_to_hbm [thread:$0]  %s421, 32, %s2, [#allocation4], 32, 32, 2
    $region21: #{tpu_custom_call.1} parent=1 // pred_fallthru
      _
    // Predicated region
    $region22: #{tpu_custom_call.1} parent=1 // pred_check
      _
    $region23: #{tpu_custom_call.1} parent=1 // pred_check_branch
      %428 = sbr.rel (0) target = $region25
    $region24: #{tpu_custom_call.1} parent=1 // pred_region
      %s430 = ssub.s32 128, 32
      %431 = vsyncadd [#allocation9], %s430
      %s432 = sshll.u32 [#allocation8], 4
      %s433 = int_to_ptr.vmem [resolvable:$true] %s432
      %438 = dma.vmem_to_hbm [thread:$0]  %s433, 32, %s3, [#allocation9], 32, 32, 2
    $region25: #{tpu_custom_call.1} parent=1 // pred_fallthru
      _
    // Predicated region
    $region26: #{tpu_custom_call.1} parent=1 // pred_check
      _
    $region27: #{tpu_custom_call.1} parent=1 // pred_check_branch
      %440 = sbr.rel (0) target = $region29
    $region28: #{tpu_custom_call.1} parent=1 // pred_region
      %441 = dma.done [#allocation4], 128
    $region29: #{tpu_custom_call.1} parent=1 // pred_fallthru
      _
    // Predicated region
    $region30: #{tpu_custom_call.1} parent=1 // pred_check
      _
    $region31: #{tpu_custom_call.1} parent=1 // pred_check_branch
      %443 = sbr.rel (0) target = $region33
    $region32: #{tpu_custom_call.1} parent=1 // pred_region
      %444 = dma.done [#allocation9], 128
    $region33: #{tpu_custom_call.1} parent=1 // pred_fallthru
      _
    %445 = vsyncpa [#allocation3], 1
    %446 = vsyncpa [#allocation6], 1
    %447 = vsyncpa [#allocation4], 1
    %448 = vsyncpa [#allocation9], 1

</llo_original>
